<compile_context>
chip_gen: v7x
topology: tpu7x:2x2x1
jax: 0.10.0
libtpu: 0.0.40
codegen_flags: <defaults>
</compile_context>

<pallas_src>
import jax
import jax.numpy as jnp
from jax.experimental import pallas as pl
from jax.experimental.pallas import tpu as pltpu


def _round_up(x: int, m: int) -> int:
    return ((x + m - 1) // m) * m


def _triplet_kernel(a_ref, p_ref, n_ref, loss_ref):
    """a/p/n: (tile_rows, D) row tiles.  loss_ref: (1, 1, tile_rows), lane-dense."""
    a = a_ref[...].astype(jnp.float32)
    p = p_ref[...].astype(jnp.float32)
    n = n_ref[...].astype(jnp.float32)

    # max(||x||, eps) == sqrt(max(||x||^2, eps^2)), so rsqrt of the clamped square
    # is exactly 1 / max(||x||, eps).  rsqrt runs on the otherwise-idle EUP.
    eps_sq = jnp.float32(1e-12)  # (1e-6) ** 2

    ap_dot = jnp.sum(a * p, axis=1, keepdims=True)  # (R, 1)
    an_dot = jnp.sum(a * n, axis=1, keepdims=True)
    a_sq = jnp.sum(a * a, axis=1, keepdims=True)
    p_sq = jnp.sum(p * p, axis=1, keepdims=True)
    n_sq = jnp.sum(n * n, axis=1, keepdims=True)

    inv_a = jax.lax.rsqrt(jnp.maximum(a_sq, eps_sq))
    inv_p = jax.lax.rsqrt(jnp.maximum(p_sq, eps_sq))
    inv_n = jax.lax.rsqrt(jnp.maximum(n_sq, eps_sq))

    cos_ap = ap_dot * (inv_a * inv_p)
    cos_an = an_dot * (inv_a * inv_n)

    ap_distances = 1.0 - cos_ap
    term2 = jnp.maximum(cos_an - 0.5, 0.0)           # F.relu(cos_an - 0.5)
    losses = ap_distances + term2                    # (R, 1)

    # Lane-dense store: relayout the small (R, 1) column into the (1, 1, R) block.
    loss_ref[...] = losses.reshape(loss_ref.shape)


def _pick_tile_rows(n: int, d: int, itemsize: int,
                    max_rows: int = 512,
                    vmem_budget_bytes: int = 16 * 1024 * 1024) -> int:
    """Largest multiple-of-8 row tile whose double-buffered inputs fit the budget."""
    n_pad8 = _round_up(n, 8)
    rows_by_vmem = max(8, vmem_budget_bytes // (3 * 2 * max(d, 1) * itemsize))
    rows = min(max_rows, rows_by_vmem, n_pad8)
    return max(8, (rows // 8) * 8)


def triplet_losses_pallas(anchor, pos, neg, *, tile_rows=None):
    """Per-sample losses: 1 - cos(anchor, pos) + relu(cos(anchor, neg) - 0.5)."""
    assert anchor.ndim == 2 and anchor.shape == pos.shape == neg.shape
    n, d = anchor.shape
    itemsize = jnp.dtype(anchor.dtype).itemsize

    if tile_rows is None:
        tile_rows = _pick_tile_rows(n, d, itemsize)
    tile_rows = max(8, (int(tile_rows) // 8) * 8)

    n_pad = _round_up(n, tile_rows)
    if n_pad != n:
        pad = ((0, n_pad - n), (0, 0))
        anchor = jnp.pad(anchor, pad)
        pos = jnp.pad(pos, pad)
        neg = jnp.pad(neg, pad)
    num_tiles = n_pad // tile_rows

    in_spec = pl.BlockSpec((tile_rows, d), lambda i: (i, 0))
    out_spec = pl.BlockSpec((1, 1, tile_rows), lambda i: (i, 0, 0))

    cost = pl.CostEstimate(
        flops=10 * n_pad * d,              # 5 multiply+add reductions over D
        transcendentals=3 * n_pad,         # 3 rsqrts per row
        bytes_accessed=3 * n_pad * d * itemsize + n_pad * 4,
    )

    losses_tiles = pl.pallas_call(
        _triplet_kernel,
        out_shape=jax.ShapeDtypeStruct((num_tiles, 1, tile_rows), jnp.float32),
        grid_spec=pltpu.PrefetchScalarGridSpec(
            num_scalar_prefetch=0,
            grid=(num_tiles,),
            in_specs=[in_spec, in_spec, in_spec],
            out_specs=out_spec,
        ),
        compiler_params=pltpu.CompilerParams(
            dimension_semantics=("parallel",),
            vmem_limit_bytes=32 * 1024 * 1024,
        ),
        cost_estimate=cost,
    )(anchor, pos, neg)

    return losses_tiles.reshape(-1)[:n]


def online_reciprocal_triplet_loss(anchor_embed_dna, pos_embed_dna, neg_embed_dna,
                                   anchor_embed_vis, pos_embed_vis, neg_embed_vis,
                                   preds=None, labels=None, labels_neg=None,
                                   *, tile_rows=None):
    """Pallas implementation of OnlineReciprocalTripletLoss.forward.

    Returns (loss_total, triplet_losses.mean(), loss_softmax) like the PyTorch module.
    """
    # TODO(synk): the triplet_selector / CrossEntropyLoss branch is dead code in the
    # reference forward (num_triplets is hard-coded to 0), so it is not implemented;
    # pos/neg DNA, anchor_vis, preds, labels and labels_neg never affect the output.
    del pos_embed_dna, neg_embed_dna, anchor_embed_vis, preds, labels, labels_neg

    losses = triplet_losses_pallas(anchor_embed_dna, pos_embed_vis, neg_embed_vis,
                                   tile_rows=tile_rows)
    loss_total = jnp.mean(losses)   # mean over the true N (padding already sliced off)
    loss_softmax = 1
    return loss_total, loss_total, loss_softmax


def _reference(anchor, pos, neg):
    eps = 1e-6

    def cos(x, y):
        nx = jnp.maximum(jnp.linalg.norm(x, axis=1), eps)
        ny = jnp.maximum(jnp.linalg.norm(y, axis=1), eps)
        return jnp.sum(x * y, axis=1) / (nx * ny)

    ap = 1.0 - cos(anchor, pos)
    term2 = jnp.maximum(cos(anchor, neg) - 0.5, 0.0)
    losses = ap + term2
    return jnp.mean(losses), losses


if __name__ == "__main__":
    key = jax.random.PRNGKey(0)
    ks = jax.random.split(key, 7)

    N, D = 20, 32   # small batch; N deliberately NOT a multiple of the test tile
    anchor_dna = jax.random.normal(ks[0], (N, D), dtype=jnp.float32)
    pos_dna = jax.random.normal(ks[1], (N, D), dtype=jnp.float32)
    neg_dna = jax.random.normal(ks[2], (N, D), dtype=jnp.float32)
    anchor_vis = jax.random.normal(ks[3], (N, D), dtype=jnp.float32)
    pos_vis = jax.random.normal(ks[4], (N, D), dtype=jnp.float32)
    neg_vis = jax.random.normal(ks[5], (N, D), dtype=jnp.float32)

    # Auxiliary inputs (mirroring the PyTorch signature; unused by the live branch).
    preds = jax.random.normal(ks[6], (3 * N, 4), dtype=jnp.float32)
    labels = jnp.zeros((N,), dtype=jnp.int32)
    labels_neg = jnp.ones((N,), dtype=jnp.int32)

    # Small tile forces a multi-step pipelined grid (3 tiles, zero-padded tail tile).
    losses = triplet_losses_pallas(anchor_dna, pos_vis, neg_vis, tile_rows=8)
    loss_total, loss_mean, loss_softmax = online_reciprocal_triplet_loss(
        anchor_dna, pos_dna, neg_dna, anchor_vis, pos_vis, neg_vis,
        preds, labels, labels_neg, tile_rows=8)
    jax.block_until_ready((losses, loss_total, loss_mean))

    ref_total, ref_losses = _reference(anchor_dna, pos_vis, neg_vis)

    assert losses.shape == (N,)
    assert jnp.allclose(losses, ref_losses, rtol=1e-5, atol=1e-5), (losses, ref_losses)
    assert jnp.allclose(loss_total, ref_total, rtol=1e-5, atol=1e-5), (loss_total, ref_total)
    assert jnp.allclose(loss_mean, ref_total, rtol=1e-5, atol=1e-5)
    assert loss_softmax == 1

    # Also exercise the default (auto-sized, single-tile here) path.
    losses_auto = triplet_losses_pallas(anchor_dna, pos_vis, neg_vis)
    jax.block_until_ready(losses_auto)
    assert jnp.allclose(losses_auto, ref_losses, rtol=1e-5, atol=1e-5)

    print("KERNEL_OK")
</pallas_src>

<mosaic_0001>
module attributes {stable_mosaic.version = 11 : i64} {
  func.func @_triplet_kernel(%arg0: i32, %arg1: memref<8x32xf32, #tpu.memory_space<vmem>>, %arg2: memref<8x32xf32, #tpu.memory_space<vmem>>, %arg3: memref<8x32xf32, #tpu.memory_space<vmem>>, %arg4: memref<1x1x8xf32, #tpu.memory_space<vmem>>) attributes {dimension_semantics = [#tpu.dimension_semantics<parallel>], iteration_bounds = array<i64: 3>, scalar_prefetch = 0 : i64, scratch_operands = 0 : i64, tpu.core_type = #tpu.core_type<tc>, window_params = [{transform_indices = @transform_0, window_bounds = array<i64: 8, 32>}, {transform_indices = @transform_1, window_bounds = array<i64: 8, 32>}, {transform_indices = @transform_2, window_bounds = array<i64: 8, 32>}, {transform_indices = @transform_3, window_bounds = array<i64: 1, 1, 8>}]} {
    %c0 = arith.constant 0 : index
    %c0_0 = arith.constant 0 : index
    %0 = vector.load %arg1[%c0, %c0_0] : memref<8x32xf32, #tpu.memory_space<vmem>>, vector<8x32xf32>
    %c0_1 = arith.constant 0 : index
    %c0_2 = arith.constant 0 : index
    %1 = vector.load %arg2[%c0_1, %c0_2] : memref<8x32xf32, #tpu.memory_space<vmem>>, vector<8x32xf32>
    %c0_3 = arith.constant 0 : index
    %c0_4 = arith.constant 0 : index
    %2 = vector.load %arg3[%c0_3, %c0_4] : memref<8x32xf32, #tpu.memory_space<vmem>>, vector<8x32xf32>
    %3 = arith.mulf %0, %1 : vector<8x32xf32>
    %cst = arith.constant dense<0.000000e+00> : vector<8xf32>
    %4 = vector.multi_reduction <add>, %3, %cst [1] : vector<8x32xf32> to vector<8xf32>
    %5 = vector.shape_cast %4 : vector<8xf32> to vector<8x1xf32>
    %6 = arith.mulf %0, %2 : vector<8x32xf32>
    %cst_5 = arith.constant dense<0.000000e+00> : vector<8xf32>
    %7 = vector.multi_reduction <add>, %6, %cst_5 [1] : vector<8x32xf32> to vector<8xf32>
    %8 = vector.shape_cast %7 : vector<8xf32> to vector<8x1xf32>
    %9 = arith.mulf %0, %0 : vector<8x32xf32>
    %cst_6 = arith.constant dense<0.000000e+00> : vector<8xf32>
    %10 = vector.multi_reduction <add>, %9, %cst_6 [1] : vector<8x32xf32> to vector<8xf32>
    %11 = vector.shape_cast %10 : vector<8xf32> to vector<8x1xf32>
    %12 = arith.mulf %1, %1 : vector<8x32xf32>
    %cst_7 = arith.constant dense<0.000000e+00> : vector<8xf32>
    %13 = vector.multi_reduction <add>, %12, %cst_7 [1] : vector<8x32xf32> to vector<8xf32>
    %14 = vector.shape_cast %13 : vector<8xf32> to vector<8x1xf32>
    %15 = arith.mulf %2, %2 : vector<8x32xf32>
    %cst_8 = arith.constant dense<0.000000e+00> : vector<8xf32>
    %16 = vector.multi_reduction <add>, %15, %cst_8 [1] : vector<8x32xf32> to vector<8xf32>
    %17 = vector.shape_cast %16 : vector<8xf32> to vector<8x1xf32>
    %cst_9 = arith.constant 9.99999996E-13 : f32
    %18 = vector.broadcast %cst_9 : f32 to vector<8x1xf32>
    %19 = arith.maximumf %11, %18 : vector<8x1xf32>
    %20 = math.rsqrt %19 : vector<8x1xf32>
    %cst_10 = arith.constant 9.99999996E-13 : f32
    %21 = vector.broadcast %cst_10 : f32 to vector<8x1xf32>
    %22 = arith.maximumf %14, %21 : vector<8x1xf32>
    %23 = math.rsqrt %22 : vector<8x1xf32>
    %cst_11 = arith.constant 9.99999996E-13 : f32
    %24 = vector.broadcast %cst_11 : f32 to vector<8x1xf32>
    %25 = arith.maximumf %17, %24 : vector<8x1xf32>
    %26 = math.rsqrt %25 : vector<8x1xf32>
    %27 = arith.mulf %20, %23 : vector<8x1xf32>
    %28 = arith.mulf %5, %27 : vector<8x1xf32>
    %29 = arith.mulf %20, %26 : vector<8x1xf32>
    %30 = arith.mulf %8, %29 : vector<8x1xf32>
    %cst_12 = arith.constant 1.000000e+00 : f32
    %31 = vector.broadcast %cst_12 : f32 to vector<8x1xf32>
    %32 = arith.subf %31, %28 : vector<8x1xf32>
    %cst_13 = arith.constant 5.000000e-01 : f32
    %33 = vector.broadcast %cst_13 : f32 to vector<8x1xf32>
    %34 = arith.subf %30, %33 : vector<8x1xf32>
    %cst_14 = arith.constant 0.000000e+00 : f32
    %35 = vector.broadcast %cst_14 : f32 to vector<8x1xf32>
    %36 = arith.maximumf %34, %35 : vector<8x1xf32>
    %37 = arith.addf %32, %36 : vector<8x1xf32>
    %38 = vector.shape_cast %37 : vector<8x1xf32> to vector<1x1x8xf32>
    %c0_15 = arith.constant 0 : index
    %c0_16 = arith.constant 0 : index
    %c0_17 = arith.constant 0 : index
    %39 = vector.load %arg4[%c0_15, %c0_16, %c0_17] : memref<1x1x8xf32, #tpu.memory_space<vmem>>, vector<1x1x8xf32>
    tpu.vector_store %arg4[%c0_15, %c0_16, %c0_17], %38 {strides = array<i32>} : memref<1x1x8xf32, #tpu.memory_space<vmem>>, vector<1x1x8xf32>,
    return
  }
  func.func @transform_0(%arg0: i32) -> (i32, i32) {
    %c0_i32 = arith.constant 0 : i32
    %c0_i32_0 = arith.constant 0 : i32
    return %arg0, %c0_i32 : i32, i32
  }
  func.func @transform_1(%arg0: i32) -> (i32, i32) {
    %c0_i32 = arith.constant 0 : i32
    %c0_i32_0 = arith.constant 0 : i32
    return %arg0, %c0_i32 : i32, i32
  }
  func.func @transform_2(%arg0: i32) -> (i32, i32) {
    %c0_i32 = arith.constant 0 : i32
    %c0_i32_0 = arith.constant 0 : i32
    return %arg0, %c0_i32 : i32, i32
  }
  func.func @transform_3(%arg0: i32) -> (i32, i32, i32) {
    %c0_i32 = arith.constant 0 : i32
    %c0_i32_0 = arith.constant 0 : i32
    %c0_i32_1 = arith.constant 0 : i32
    return %arg0, %c0_i32, %c0_i32_0 : i32, i32, i32
  }
}

</mosaic_0001>

<llo_original>
// kernel: tpu_custom_call.1
$region0: #{tpu_custom_call.1}
  #allocation0 [shape = 'u32[]', space=smem, size = 0x4, offset = 0x4, fixed_abs, tag = 'smem constant byte address 0x4 - core index']
  #allocation1 [shape = 'u32[144,128]{1,0:T(1,128)}', space=vmem, size = 0x12000, scoped, tag = 'internal scratch']
  %s0 = inlined_call_operand.hbm [shape: f32[24,32], index: 0, kind: input, shape index: {}]
  %s1 = inlined_call_operand.hbm [shape: f32[24,32], index: 1, kind: input, shape index: {}]
  %s2 = inlined_call_operand.hbm [shape: f32[24,32], index: 2, kind: input, shape index: {}]
  %s3 = inlined_call_operand.hbm [shape: f32[3,1,8], index: 3, kind: output, shape index: {}]
  %s4 = sld [smem:[#allocation0]]
  $region57: #{tpu_custom_call.1} parent=0
    _
  %s6 = ssub.s32 1, %s4
  %s7 = scalar_select 0, %s6, %s4
  $region1: #{tpu_custom_call.1} parent=0
    #allocation2 [shape = 'u8[8192]{0}', space=vmem, size = 0x2000, scoped, tag = 'input window, operand 0']
    #allocation3 [shape = 's32[2]{0}', space=sflag, size = 0x8, scoped, tag = 'scoped memory for tpu_custom_call.1']
    #allocation4 [shape = 's32[2]{0}', space=sflag, size = 0x8, scoped, tag = 'scoped memory for tpu_custom_call.1']
    #allocation5 [shape = 'u8[8192]{0}', space=vmem, size = 0x2000, scoped, tag = 'input window, operand 1']
    #allocation6 [shape = 's32[2]{0}', space=sflag, size = 0x8, scoped, tag = 'scoped memory for tpu_custom_call.1']
    #allocation7 [shape = 'u8[8192]{0}', space=vmem, size = 0x2000, scoped, tag = 'input window, operand 2']
    #allocation8 [shape = 'u8[1024]{0}', space=vmem, size = 0x400, scoped, tag = 'output window, operand 0']
    %8 = vsyncpa [#allocation3], 0
    %s9 = scalar_lea.sflag [#allocation3], 1
    %10 = vsyncpa %s9, 0
    %11 = vsyncpa [#allocation6], 0
    %s12 = scalar_lea.sflag [#allocation6], 1
    %13 = vsyncpa %s12, 0
    %14 = vsyncpa [#allocation4], 0
    %s15 = scalar_lea.sflag [#allocation4], 1
    %16 = vsyncpa %s15, 0
    loop: start=0, step=1, limit=5
    $region2: #{tpu_custom_call.1} parent=1 // loop_pre_header
      _
    $region3: #{tpu_custom_call.1} parent=1 // loop_header
      %s18 = sphi 0, %s22
      %p19 = scmp.ge.s32.totalorder %s18, 5
      %s28 = sphi 0, %s30
      %s31 = sphi 0, %s28
      %s32 = sphi 0, %s31
      %s48 = sphi 0, %s32
      %s54 = sphi 0, %s56
      %s57 = sphi 0, %s54
      %s58 = sphi 0, %s57
      %s74 = sphi 0, %s58
      %s80 = sphi 0, %s82
      %s83 = sphi 0, %s80
      %s84 = sphi 0, %s83
      %s100 = sphi 0, %s84
      %s106 = sphi 0, %s108
      %s109 = sphi 0, %s106
      %s110 = sphi 0, %s109
      %s126 = sphi 0, %s110
    $region4: #{tpu_custom_call.1} parent=1 // loop_header_branch
      %21 = sbr.rel (%p19) target = $region8
    $region5: #{tpu_custom_call.1} parent=1 // loop_body
      %s23 = ssub.s32 %s18, 1
      %s24 = ssub.s32 %s18, 2
      %s25 = sadd.s32 %s18, 1
      %s26 = ssub.s32 %s18, %s25
      %p27 = scmp.eq.s32.totalorder %s26, 0
      %s29 = sadd.s32 %s28, 1
      %s30 = scalar_select %p27, %s28, %s29
      %p33 = pneg %p27
      %p34 = scmp.eq.s32.totalorder %s18, 2
      %p35 = por %p33, %p34
      %p36 = scmp.ne.s32.totalorder %s28, %s31
      %p37 = scmp.eq.s32.totalorder %s18, 0
      %p38 = por %p36, %p37
      %p39 = scmp.ne.s32.totalorder %s28, %s31
      %p40 = scmp.eq.s32.totalorder %s23, 2
      %p41 = por %p39, %p40
      %p42 = scmp.ne.s32.totalorder %s31, %s32
      %p43 = scmp.eq.s32.totalorder %s23, 0
      %p44 = por %p42, %p43
      %p45 = scmp.ne.s32.totalorder %s31, %s32
      %p46 = scmp.eq.s32.totalorder %s24, 2
      %p47 = por %p45, %p46
      %p49 = scmp.ne.s32.totalorder %s32, %s48
      %p50 = scmp.eq.s32.totalorder %s24, 0
      %p51 = por %p49, %p50
      %s52 = ssub.s32 %s18, %s25
      %p53 = scmp.eq.s32.totalorder %s52, 0
      %s55 = sadd.s32 %s54, 1
      %s56 = scalar_select %p53, %s54, %s55
      %p59 = pneg %p53
      %p60 = scmp.eq.s32.totalorder %s18, 2
      %p61 = por %p59, %p60
      %p62 = scmp.ne.s32.totalorder %s54, %s57
      %p63 = scmp.eq.s32.totalorder %s18, 0
      %p64 = por %p62, %p63
      %p65 = scmp.ne.s32.totalorder %s54, %s57
      %p66 = scmp.eq.s32.totalorder %s23, 2
      %p67 = por %p65, %p66
      %p68 = scmp.ne.s32.totalorder %s57, %s58
      %p69 = scmp.eq.s32.totalorder %s23, 0
      %p70 = por %p68, %p69
      %p71 = scmp.ne.s32.totalorder %s57, %s58
      %p72 = scmp.eq.s32.totalorder %s24, 2
      %p73 = por %p71, %p72
      %p75 = scmp.ne.s32.totalorder %s58, %s74
      %p76 = scmp.eq.s32.totalorder %s24, 0
      %p77 = por %p75, %p76
      %s78 = ssub.s32 %s18, %s25
      %p79 = scmp.eq.s32.totalorder %s78, 0
      %s81 = sadd.s32 %s80, 1
      %s82 = scalar_select %p79, %s80, %s81
      %p85 = pneg %p79
      %p86 = scmp.eq.s32.totalorder %s18, 2
      %p87 = por %p85, %p86
      %p88 = scmp.ne.s32.totalorder %s80, %s83
      %p89 = scmp.eq.s32.totalorder %s18, 0
      %p90 = por %p88, %p89
      %p91 = scmp.ne.s32.totalorder %s80, %s83
      %p92 = scmp.eq.s32.totalorder %s23, 2
      %p93 = por %p91, %p92
      %p94 = scmp.ne.s32.totalorder %s83, %s84
      %p95 = scmp.eq.s32.totalorder %s23, 0
      %p96 = por %p94, %p95
      %p97 = scmp.ne.s32.totalorder %s83, %s84
      %p98 = scmp.eq.s32.totalorder %s24, 2
      %p99 = por %p97, %p98
      %p101 = scmp.ne.s32.totalorder %s84, %s100
      %p102 = scmp.eq.s32.totalorder %s24, 0
      %p103 = por %p101, %p102
      %s104 = ssub.s32 %s18, %s25
      %p105 = scmp.eq.s32.totalorder %s104, 0
      %s107 = sadd.s32 %s106, 1
      %s108 = scalar_select %p105, %s106, %s107
      %p111 = pneg %p105
      %p112 = scmp.eq.s32.totalorder %s18, 2
      %p113 = por %p111, %p112
      %p114 = scmp.ne.s32.totalorder %s106, %s109
      %p115 = scmp.eq.s32.totalorder %s18, 0
      %p116 = por %p114, %p115
      %p117 = scmp.ne.s32.totalorder %s106, %s109
      %p118 = scmp.eq.s32.totalorder %s23, 2
      %p119 = por %p117, %p118
      %p120 = scmp.ne.s32.totalorder %s109, %s110
      %p121 = scmp.eq.s32.totalorder %s23, 0
      %p122 = por %p120, %p121
      %p123 = scmp.ne.s32.totalorder %s109, %s110
      %p124 = scmp.eq.s32.totalorder %s24, 2
      %p125 = por %p123, %p124
      %p127 = scmp.ne.s32.totalorder %s110, %s126
      %p128 = scmp.eq.s32.totalorder %s24, 0
      %p129 = por %p127, %p128
      %p130 = scmp.le.s32.totalorder 1, %s18
      %p131 = scmp.lt.s32.totalorder %s18, 4
      %p132 = pnand %p130, %p131
      %p133 = pneg %p132
      // Predicated region
      $region9: #{tpu_custom_call.1} parent=5 // pred_check
        _
      $region10: #{tpu_custom_call.1} parent=5 // pred_check_branch
        %135 = sbr.rel (%p132) target = $region12
      $region11: #{tpu_custom_call.1} parent=5 // pred_region
        %s136 = ssub.s32 %s18, 1
      $region12: #{tpu_custom_call.1} parent=5 // pred_fallthru
        _
      %p137 = scmp.lt.s32.totalorder %s18, 3
      // Predicated region
      $region13: #{tpu_custom_call.1} parent=5 // pred_check
        %p138 = pneg %p137
      $region14: #{tpu_custom_call.1} parent=5 // pred_check_branch
        %140 = sbr.rel (%p138) target = $region16
      $region15: #{tpu_custom_call.1} parent=5 // pred_region
        // Predicated region
        $region17: #{tpu_custom_call.1} parent=15 // pred_check
          %p141 = pneg %p38
        $region18: #{tpu_custom_call.1} parent=15 // pred_check_branch
          %143 = sbr.rel (%p141) target = $region20
        $region19: #{tpu_custom_call.1} parent=15 // pred_region
          %s144 = sand.u32 %s28, 1
          %s145 = scalar_lea.sflag [#allocation3], %s144
          %s146 = sand.u32 %s28, 1
          %s147 = smul.addr %s146, 8
          %s148 = scalar_lea.vmem [#allocation2], %s147
          %s150 = ssub.s32 128, 128
          %151 = vsyncadd %s145, %s150
          %s152 = smul.addr %s18, 128
          %s153 = scalar_lea.hbm %s0, %s152
          %s155 = sshll.u32 %s148, 4
          %s156 = int_to_ptr.vmem [resolvable:$true] %s155
          %158 = dma.hbm_to_vmem [thread:$0]  %s153, 128, %s156, %s145
        $region20: #{tpu_custom_call.1} parent=15 // pred_fallthru
          _
        // Predicated region
        $region21: #{tpu_custom_call.1} parent=15 // pred_check
          %p159 = pneg %p64
        $region22: #{tpu_custom_call.1} parent=15 // pred_check_branch
          %161 = sbr.rel (%p159) target = $region24
        $region23: #{tpu_custom_call.1} parent=15 // pred_region
          %s162 = sand.u32 %s18, 1
          %s163 = scalar_lea.sflag [#allocation6], %s162
          %s164 = sand.u32 %s54, 1
          %s165 = smul.addr %s164, 8
          %s166 = scalar_lea.vmem [#allocation5], %s165
          %s168 = ssub.s32 128, 128
          %169 = vsyncadd %s163, %s168
          %s170 = smul.addr %s18, 128
          %s171 = scalar_lea.hbm %s1, %s170
          %s173 = sshll.u32 %s166, 4
          %s174 = int_to_ptr.vmem [resolvable:$true] %s173
          %176 = dma.hbm_to_vmem [thread:$0]  %s171, 128, %s174, %s163
        $region24: #{tpu_custom_call.1} parent=15 // pred_fallthru
          _
        // Predicated region
        $region25: #{tpu_custom_call.1} parent=15 // pred_check
          %p177 = pneg %p90
        $region26: #{tpu_custom_call.1} parent=15 // pred_check_branch
          %179 = sbr.rel (%p177) target = $region28
        $region27: #{tpu_custom_call.1} parent=15 // pred_region
          %s180 = sand.u32 %s18, 1
          %s181 = scalar_lea.sflag [#allocation6], %s180
          %s182 = sand.u32 %s80, 1
          %s183 = smul.addr %s182, 8
          %s184 = scalar_lea.vmem [#allocation7], %s183
          %s186 = ssub.s32 128, 128
          %187 = vsyncadd %s181, %s186
          %s188 = smul.addr %s18, 128
          %s189 = scalar_lea.hbm %s2, %s188
          %s191 = sshll.u32 %s184, 4
          %s192 = int_to_ptr.vmem [resolvable:$true] %s191
          %194 = dma.hbm_to_vmem [thread:$0]  %s189, 128, %s192, %s181
        $region28: #{tpu_custom_call.1} parent=15 // pred_fallthru
          _
      $region16: #{tpu_custom_call.1} parent=5 // pred_fallthru
        _
      %p195 = scmp.le.s32.totalorder 1, %s18
      %p196 = scmp.lt.s32.totalorder %s18, 4
      %p197 = pnand %p195, %p196
      %p198 = pneg %p197
      // Predicated region
      $region29: #{tpu_custom_call.1} parent=5 // pred_check
        _
      $region30: #{tpu_custom_call.1} parent=5 // pred_check_branch
        %200 = sbr.rel (%p197) target = $region32
      $region31: #{tpu_custom_call.1} parent=5 // pred_region
        %s201 = ssub.s32 %s18, 1
        %s202 = sand.u32 %s31, 1
        %s203 = scalar_lea.sflag [#allocation3], %s202
        %s204 = sand.u32 %s31, 1
        %s205 = smul.addr %s204, 8
        %s206 = scalar_lea.vmem [#allocation2], %s205
        // Predicated region
        $region33: #{tpu_custom_call.1} parent=31 // pred_check
          %p207 = pneg %p44
        $region34: #{tpu_custom_call.1} parent=31 // pred_check_branch
          %209 = sbr.rel (%p207) target = $region36
        $region35: #{tpu_custom_call.1} parent=31 // pred_region
          %210 = dma.done %s203, 128
        $region36: #{tpu_custom_call.1} parent=31 // pred_fallthru
          _
        %s211 = sand.u32 %s23, 1
        %s212 = scalar_lea.sflag [#allocation6], %s211
        %s213 = sand.u32 %s57, 1
        %s214 = smul.addr %s213, 8
        %s215 = scalar_lea.vmem [#allocation5], %s214
        // Predicated region
        $region37: #{tpu_custom_call.1} parent=31 // pred_check
          %p216 = pneg %p70
        $region38: #{tpu_custom_call.1} parent=31 // pred_check_branch
          %218 = sbr.rel (%p216) target = $region40
        $region39: #{tpu_custom_call.1} parent=31 // pred_region
          %219 = dma.done %s212, 128
        $region40: #{tpu_custom_call.1} parent=31 // pred_fallthru
          _
        %s220 = sand.u32 %s23, 1
        %s221 = scalar_lea.sflag [#allocation6], %s220
        %s222 = sand.u32 %s83, 1
        %s223 = smul.addr %s222, 8
        %s224 = scalar_lea.vmem [#allocation7], %s223
        // Predicated region
        $region41: #{tpu_custom_call.1} parent=31 // pred_check
          %p225 = pneg %p96
        $region42: #{tpu_custom_call.1} parent=31 // pred_check_branch
          %227 = sbr.rel (%p225) target = $region44
        $region43: #{tpu_custom_call.1} parent=31 // pred_region
          %228 = dma.done %s221, 128
        $region44: #{tpu_custom_call.1} parent=31 // pred_fallthru
          _
        %s229 = sand.u32 %s31, 1
        %s230 = scalar_lea.sflag [#allocation3], %s229
        %s231 = sand.u32 %s31, 1
        %s232 = smul.addr %s231, 8
        %s233 = scalar_lea.vmem [#allocation2], %s232
        %p234 = pneg %p44
        %p235 = pneg %p41
        %s236 = sand.u32 %s23, 1
        %s237 = scalar_lea.sflag [#allocation6], %s236
        %s238 = sand.u32 %s57, 1
        %s239 = smul.addr %s238, 8
        %s240 = scalar_lea.vmem [#allocation5], %s239
        %p241 = pneg %p70
        %p242 = pneg %p67
        %s243 = sand.u32 %s23, 1
        %s244 = scalar_lea.sflag [#allocation6], %s243
        %s245 = sand.u32 %s83, 1
        %s246 = smul.addr %s245, 8
        %s247 = scalar_lea.vmem [#allocation7], %s246
        %p248 = pneg %p96
        %p249 = pneg %p93
        %p250 = pneg %p122
        %p251 = pneg %p119
        %s252 = sand.u32 %s109, 1
        %s253 = scalar_lea.sflag [#allocation4], %s252
        %s254 = sand.u32 %s109, 1
        %s255 = scalar_lea.vmem [#allocation8], %s254
        %v256 = vld [vmem:[%s206] sm:$0xff]
        %v257 = vld [vmem:[%s215] sm:$0xff]
        %v258 = vld [vmem:[%s224] sm:$0xff]
        %v259 = vmul.f32 %v256, %v257
        %vm260 = vcmask 261120
        %v261 = vsel %vm260, %v259, 0.0
        %262 = vadd.xlane.f32.xlu0 %v261
        %v263 = vpop.xlane.xlu0 %262
        %v264 = vmul.f32 %v256, %v258
        %v265 = vsel %vm260, %v264, 0.0
        %266 = vadd.xlane.f32.xlu0 %v265
        %v267 = vpop.xlane.xlu0 %266
        %v268 = vmul.f32 %v256, %v256
        %v269 = vsel %vm260, %v268, 0.0
        %270 = vadd.xlane.f32.xlu0 %v269
        %v271 = vpop.xlane.xlu0 %270
        %v272 = vmul.f32 %v257, %v257
        %v273 = vsel %vm260, %v272, 0.0
        %274 = vadd.xlane.f32.xlu0 %v273
        %v275 = vpop.xlane.xlu0 %274
        %v276 = vmul.f32 %v258, %v258
        %v277 = vsel %vm260, %v276, 0.0
        %278 = vadd.xlane.f32.xlu0 %v277
        %v279 = vpop.xlane.xlu0 %278
        %v280 = vmax.f32 %v271, 1e-12
        %v281 = vrsqrt.pop %v280
        %v282 = vmax.f32 %v275, 1e-12
        %v283 = vrsqrt.pop %v282
        %v284 = vmax.f32 %v279, 1e-12
        %v285 = vrsqrt.pop %v284
        %v286 = vmul.f32 %v281, %v283
        %v287 = vmul.f32 %v263, %v286
        %v288 = vmul.f32 %v281, %v285
        %v289 = vmul.f32 %v267, %v288
        %v290 = vsub.f32 1.0, %v287
        %v291 = vsub.f32 %v289, 0.5
        %v292 = vmax.f32 %v291, 0.0
        %v293 = vadd.f32 %v290, %v292
        %v295 = vlaneseq
        %v296 = vand.u32 %v295, 127
        %v297 = vlaneseq
        %v298 = vshrl.u32 %v297, 7
        %v299 = vsub.s32 %v296, %v298
        %v300 = vrot.slane %v293, %v299
        %vm302 = vcmask 57344
        %303 = vst.msk [vmem:[%s255] sm:$0x1] %vm302, %v300
        %s304 = sand.u32 %s109, 1
        %s305 = scalar_lea.sflag [#allocation4], %s304
        %s306 = sand.u32 %s109, 1
        %s307 = scalar_lea.vmem [#allocation8], %s306
        // Predicated region
        $region45: #{tpu_custom_call.1} parent=31 // pred_check
          %p308 = pneg %p119
        $region46: #{tpu_custom_call.1} parent=31 // pred_check_branch
          %310 = sbr.rel (%p308) target = $region48
        $region47: #{tpu_custom_call.1} parent=31 // pred_region
          %s312 = ssub.s32 16, 16
          %313 = vsyncadd %s305, %s312
          %s314 = smul.addr %s23, 16
          %s315 = scalar_lea.hbm %s3, %s314
          %s317 = sshll.u32 %s307, 4
          %s318 = int_to_ptr.vmem [resolvable:$true] %s317
          %320 = dma.vmem_to_hbm [thread:$0]  %s318, 16, %s315, %s305
        $region48: #{tpu_custom_call.1} parent=31 // pred_fallthru
          _
      $region32: #{tpu_custom_call.1} parent=5 // pred_fallthru
        _
      %p321 = scmp.le.s32.totalorder 2, %s18
      // Predicated region
      $region49: #{tpu_custom_call.1} parent=5 // pred_check
        %p322 = pneg %p321
      $region50: #{tpu_custom_call.1} parent=5 // pred_check_branch
        %324 = sbr.rel (%p322) target = $region52
      $region51: #{tpu_custom_call.1} parent=5 // pred_region
        %s325 = ssub.s32 %s18, 2
        // Predicated region
        $region53: #{tpu_custom_call.1} parent=51 // pred_check
          %p326 = pneg %p125
        $region54: #{tpu_custom_call.1} parent=51 // pred_check_branch
          %328 = sbr.rel (%p326) target = $region56
        $region55: #{tpu_custom_call.1} parent=51 // pred_region
          %s329 = sand.u32 %s110, 1
          %s330 = scalar_lea.sflag [#allocation4], %s329
          %s331 = sand.u32 %s110, 1
          %s332 = scalar_lea.vmem [#allocation8], %s331
          %333 = dma.done %s330, 16
        $region56: #{tpu_custom_call.1} parent=51 // pred_fallthru
          _
      $region52: #{tpu_custom_call.1} parent=5 // pred_fallthru
        _
    $region6: #{tpu_custom_call.1} parent=1 // loop_footer
      %s22 = sadd.s32 1, %s18
    $region7: #{tpu_custom_call.1} parent=1 // loop_footer_branch
      %17 = sbr.rel target = $region3
    $region8: #{tpu_custom_call.1} parent=1 // loop_exit
      _
    %334 = vsyncpa [#allocation3], 1
    %s335 = scalar_lea.sflag [#allocation3], 1
    %336 = vsyncpa %s335, 1
    %337 = vsyncpa [#allocation6], 1
    %s338 = scalar_lea.sflag [#allocation6], 1
    %339 = vsyncpa %s338, 1
    %340 = vsyncpa [#allocation4], 1
    %s341 = scalar_lea.sflag [#allocation4], 1
    %342 = vsyncpa %s341, 1

</llo_original>
